<compile_context>
chip_gen: v7x
topology: tpu7x:2x2x1
jax: 0.10.0
libtpu: 0.0.40
codegen_flags: <defaults>
</compile_context>

<pallas_src>
import functools
import math

import jax
import jax.numpy as jnp
from jax import lax
from jax.experimental import pallas as pl
from jax.experimental.pallas import tpu as pltpu

_VMEM_LIMIT = 48 * 1024 * 1024        # fits v7x's 64 MiB physical VMEM per TC
_TILE_TARGET_BYTES = 6 * 1024 * 1024  # streaming tile target (f32 bytes)
_FUSED_BYTES_LIMIT = 6 * 1024 * 1024  # fused single-call path threshold


# ----------------------------------------------------------------------------
# Kernels
# ----------------------------------------------------------------------------
def _stats_kernel(x_ref, pmean_ref, pm2_ref, mean_acc, m2_acc, *,
                  folded_rows, tile_rows, tiles_per_split, need_mask):
    """Per-split centered partial moments via Chan's parallel combine."""
    t = pl.program_id(1)

    @pl.when(t == 0)
    def _init():
        mean_acc[...] = jnp.zeros_like(mean_acc)
        m2_acc[...] = jnp.zeros_like(m2_acc)

    x = x_ref[...].astype(jnp.float32)                     # (tile_rows, lanes)

    if need_mask:
        c = pl.program_id(0)
        row0 = (c * tiles_per_split + t) * tile_rows
        rid = lax.broadcasted_iota(jnp.int32, (tile_rows, 1), 0) + row0
        valid = rid < folded_rows
        tile_cnt = jnp.clip(folded_rows - row0, 0, tile_rows).astype(jnp.float32)
        safe_cnt = jnp.maximum(tile_cnt, 1.0)
        xm = jnp.where(valid, x, 0.0)
        tile_mean = jnp.sum(xm, axis=0, keepdims=True) / safe_cnt
        centered = jnp.where(valid, x - tile_mean, 0.0)
        rows_avail = jnp.clip(folded_rows - c * (tiles_per_split * tile_rows),
                              0, tiles_per_split * tile_rows)
        prev_cnt = jnp.minimum(t * tile_rows, rows_avail).astype(jnp.float32)
    else:
        tile_cnt = jnp.float32(tile_rows)
        tile_mean = jnp.mean(x, axis=0, keepdims=True)
        centered = x - tile_mean
        prev_cnt = (t * tile_rows).astype(jnp.float32)

    tile_m2 = jnp.sum(centered * centered, axis=0, keepdims=True)

    # Chan's parallel-variance combine of the split accumulator with this tile
    # (safe for empty tiles: tile_cnt == 0 contributes exactly nothing).
    tot = prev_cnt + tile_cnt
    tot_safe = jnp.maximum(tot, 1.0)
    delta = tile_mean - mean_acc[...]
    m2_acc[...] = m2_acc[...] + tile_m2 + delta * delta * (prev_cnt * tile_cnt / tot_safe)
    mean_acc[...] = mean_acc[...] + delta * (tile_cnt / tot_safe)

    @pl.when(t == pl.num_programs(1) - 1)
    def _write():
        pmean_ref[...] = mean_acc[...].reshape(pmean_ref.shape)
        pm2_ref[...] = m2_acc[...].reshape(pm2_ref.shape)


def _normalize_kernel(x_ref, scale_ref, shift_ref, y_ref, *, clip_in, clip_out):
    """y = clip-variant(x * scale + shift); scale/shift precomputed in wrapper."""
    x = x_ref[...].astype(jnp.float32)
    if clip_in:                                   # unnorm path
        x = jnp.clip(x, -5.0, 5.0)
    y = x * scale_ref[...] + shift_ref[...]
    if clip_out:                                  # standard normalize path
        y = jnp.clip(y, -5.0, 5.0)
    y_ref[...] = y.astype(y_ref.dtype)


def _fused_kernel(x_ref, mean_ref, var_ref, count_ref,
                  y_ref, nmean_ref, nvar_ref, ncount_ref, *,
                  n_rows, folded_rows, feat, fold, epsilon, norm_only, unnorm):
    """Single-call path: batch stats + running update + normalize, x in VMEM."""
    x = x_ref[...].astype(jnp.float32)                     # (folded_rows, lanes)

    col_mean = jnp.mean(x, axis=0, keepdims=True)          # (1, lanes)
    centered = x - col_mean
    col_m2 = jnp.sum(centered * centered, axis=0, keepdims=True)

    if fold == 1:
        bm, bm2 = col_mean, col_m2
    else:
        # Merge the `fold` equal-count lane groups back to per-feature stats.
        g_mean = [col_mean[:, j * feat:(j + 1) * feat] for j in range(fold)]
        g_m2 = [col_m2[:, j * feat:(j + 1) * feat] for j in range(fold)]
        bm = sum(g_mean) * jnp.float32(1.0 / fold)
        bm2 = sum(g_m2) + jnp.float32(folded_rows) * sum((g - bm) * (g - bm)
                                                         for g in g_mean)

    bc = jnp.float32(n_rows)
    bvar = bm2 / jnp.float32(n_rows - 1)                    # unbiased (torch.var)

    mean = mean_ref[...]                                    # (1, D)
    var = var_ref[...]
    cnt = count_ref[...]                                    # (1, 1)

    # _update_mean_var_count_from_moments
    delta = bm - mean
    tot = cnt + bc
    new_mean = mean + delta * (bc / tot)
    new_var = (var * cnt + bvar * bc + delta * delta * (cnt * bc / tot)) / tot

    nmean_ref[...] = new_mean
    nvar_ref[...] = new_var
    ncount_ref[...] = tot

    eps = jnp.float32(epsilon)
    if unnorm:
        scale = jnp.sqrt(new_var + eps)
        shift = new_mean
        xn = jnp.clip(x, -5.0, 5.0)
    elif norm_only:
        scale = lax.rsqrt(new_var + eps)
        shift = jnp.zeros_like(new_mean)
        xn = x
    else:
        scale = lax.rsqrt(new_var + eps)
        shift = -new_mean * scale
        xn = x
    if fold > 1:
        scale = jnp.concatenate([scale] * fold, axis=1)
        shift = jnp.concatenate([shift] * fold, axis=1)
    y = xn * scale + shift
    if (not unnorm) and (not norm_only):
        y = jnp.clip(y, -5.0, 5.0)
    y_ref[...] = y.astype(y_ref.dtype)


# ----------------------------------------------------------------------------
# Wrapper
# ----------------------------------------------------------------------------
def _pick_fold(n, d):
    """lcm-based lane folding: x:(N,D) -> (N/f, f*D) for lane-dense I/O."""
    if d % 128 == 0:
        return 1
    fold = 128 // math.gcd(d, 128)      # = lcm(d, 128) // d
    if fold <= 16 and n % fold == 0:
        return fold
    return 1


def _sublane_multiple(dtype):
    return {4: 8, 2: 16, 1: 32}.get(jnp.dtype(dtype).itemsize, 8)


def _pick_tile_rows(folded_rows, lanes, dtype, requested=None):
    sub = _sublane_multiple(dtype)
    if requested is None:
        requested = max(sub, _TILE_TARGET_BYTES // (lanes * 4))
    t = int(min(int(requested), folded_rows))
    if t >= folded_rows:
        return folded_rows
    t = (t // sub) * sub
    if t < sub:
        return folded_rows
    return t


def running_mean_std_forward(x, running_mean, running_var, count, *,
                             epsilon=1e-5, training=True, norm_only=False,
                             unnorm=False, tile_rows=None, allow_fused=True):
    """RunningMeanStd forward (per_channel=False, insize=D).

    Returns (y, new_running_mean, new_running_var, new_count).
    """
    n, d = x.shape

    fold = _pick_fold(n, d)
    folded_rows = n // fold
    lanes = d * fold
    x_f = x.reshape(folded_rows, lanes)            # row-major fold: free bitcast

    rm32 = running_mean.astype(jnp.float32).reshape(d)
    rv32 = running_var.astype(jnp.float32).reshape(d)
    cnt32 = jnp.asarray(count, jnp.float32).reshape(())

    # ---------------- Fused single-call path (x resident in VMEM) -----------
    x_bytes = folded_rows * lanes * 4
    if training and allow_fused and x_bytes <= _FUSED_BYTES_LIMIT:
        fused = functools.partial(
            _fused_kernel, n_rows=n, folded_rows=folded_rows, feat=d, fold=fold,
            epsilon=epsilon, norm_only=norm_only, unnorm=unnorm)
        y_f, nm, nv, nc = pl.pallas_call(
            fused,
            out_shape=(
                jax.ShapeDtypeStruct((folded_rows, lanes), x.dtype),
                jax.ShapeDtypeStruct((1, d), jnp.float32),
                jax.ShapeDtypeStruct((1, d), jnp.float32),
                jax.ShapeDtypeStruct((1, 1), jnp.float32),
            ),
            compiler_params=pltpu.CompilerParams(vmem_limit_bytes=_VMEM_LIMIT),
        )(x_f, rm32.reshape(1, d), rv32.reshape(1, d), cnt32.reshape(1, 1))
        return (y_f.reshape(n, d), nm.reshape(d), nv.reshape(d), nc.reshape(()))

    # ---------------- Streaming path ----------------------------------------
    tr = _pick_tile_rows(folded_rows, lanes, x.dtype, tile_rows)
    num_tiles = -(-folded_rows // tr)

    if training:
        # Split the stats grid two ways so v7x's two TensorCores both stream
        # HBM; per-split partials are merged below with trivial (D,) JAX ops.
        num_splits = 2 if num_tiles >= 2 else 1
        tps = -(-num_tiles // num_splits)
        need_mask = (folded_rows % tr != 0) or (num_tiles % num_splits != 0)

        if need_mask:
            x_map = lambda c, t: (jnp.minimum(c * tps + t, num_tiles - 1), 0)
        else:
            x_map = lambda c, t: (c * tps + t, 0)

        stats = functools.partial(
            _stats_kernel, folded_rows=folded_rows, tile_rows=tr,
            tiles_per_split=tps, need_mask=need_mask)
        pmean, pm2 = pl.pallas_call(
            stats,
            grid=(num_splits, tps),
            in_specs=[pl.BlockSpec((tr, lanes), x_map)],
            out_specs=(
                pl.BlockSpec((1, 1, lanes), lambda c, t: (c, 0, 0)),
                pl.BlockSpec((1, 1, lanes), lambda c, t: (c, 0, 0)),
            ),
            out_shape=(
                jax.ShapeDtypeStruct((num_splits, 1, lanes), jnp.float32),
                jax.ShapeDtypeStruct((num_splits, 1, lanes), jnp.float32),
            ),
            scratch_shapes=[pltpu.VMEM((1, lanes), jnp.float32),
                            pltpu.VMEM((1, lanes), jnp.float32)],
            compiler_params=pltpu.CompilerParams(
                dimension_semantics=("parallel", "arbitrary"),
                vmem_limit_bytes=_VMEM_LIMIT),
        )(x_f)

        # Weighted Chan merge over (num_splits x fold) equal-feature groups,
        # then the running-stat update -- tiny (D,)-sized XLA ops.
        split_counts = [max(0, min(folded_rows - c * tps * tr, tps * tr))
                        for c in range(num_splits)]
        gm = pmean.reshape(num_splits, fold, d)
        gm2 = pm2.reshape(num_splits, fold, d)
        gcnt = jnp.asarray(split_counts, jnp.float32).reshape(num_splits, 1, 1)
        batch_mean = jnp.sum(gcnt * gm, axis=(0, 1)) / jnp.float32(n)
        dev = gm - batch_mean.reshape(1, 1, d)
        batch_m2 = jnp.sum(gm2, axis=(0, 1)) + jnp.sum(gcnt * dev * dev, axis=(0, 1))
        batch_var = batch_m2 / jnp.float32(n - 1)           # unbiased (torch.var)

        delta = batch_mean - rm32
        tot = cnt32 + jnp.float32(n)
        new_mean = rm32 + delta * (n / tot)
        new_var = (rv32 * cnt32 + batch_var * n + delta * delta * (cnt32 * n / tot)) / tot
        new_count = tot
    else:
        new_mean, new_var, new_count = rm32, rv32, cnt32

    # Precompute scale/shift once (no per-step rsqrt in the kernel) and tile to
    # the folded lane layout.
    eps = jnp.float32(epsilon)
    if unnorm:
        scale = jnp.sqrt(new_var + eps)
        shift = new_mean
    elif norm_only:
        scale = lax.rsqrt(new_var + eps)
        shift = jnp.zeros_like(new_mean)
    else:
        scale = lax.rsqrt(new_var + eps)
        shift = -new_mean * scale
    scale_l = jnp.tile(scale.reshape(1, d), (1, fold))
    shift_l = jnp.tile(shift.reshape(1, d), (1, fold))

    norm = functools.partial(_normalize_kernel, clip_in=unnorm,
                             clip_out=(not unnorm and not norm_only))
    y_f = pl.pallas_call(
        norm,
        grid=(num_tiles,),
        in_specs=[pl.BlockSpec((tr, lanes), lambda i: (i, 0)),
                  pl.BlockSpec((1, lanes), lambda i: (0, 0)),
                  pl.BlockSpec((1, lanes), lambda i: (0, 0))],
        out_specs=pl.BlockSpec((tr, lanes), lambda i: (i, 0)),
        out_shape=jax.ShapeDtypeStruct((folded_rows, lanes), x.dtype),
        compiler_params=pltpu.CompilerParams(
            dimension_semantics=("parallel",),
            vmem_limit_bytes=_VMEM_LIMIT),
    )(x_f, scale_l, shift_l)

    return y_f.reshape(n, d), new_mean, new_var, new_count


# ----------------------------------------------------------------------------
# Pure-JAX reference (mirrors the PyTorch module)
# ----------------------------------------------------------------------------
def _reference(x, running_mean, running_var, count, *, epsilon=1e-5, training=True,
               norm_only=False, unnorm=False):
    x32 = x.astype(jnp.float32)
    mean = running_mean.astype(jnp.float32)
    var = running_var.astype(jnp.float32)
    cnt = count.astype(jnp.float32)
    if training:
        n = x.shape[0]
        bm = jnp.mean(x32, axis=0)
        bv = jnp.sum((x32 - bm) ** 2, axis=0) / (n - 1)
        delta = bm - mean
        tot = cnt + n
        mean = mean + delta * n / tot
        var = (var * cnt + bv * n + delta ** 2 * cnt * n / tot) / tot
        cnt = tot
    std = jnp.sqrt(var + epsilon)
    if unnorm:
        y = jnp.clip(x32, -5.0, 5.0) * std + mean
    elif norm_only:
        y = x32 / std
    else:
        y = jnp.clip((x32 - mean) / std, -5.0, 5.0)
    return y, mean, var, cnt


if __name__ == "__main__":
    key = jax.random.PRNGKey(0)
    keys = jax.random.split(key, 8)

    def check(name, n, d, k, **kw):
        x = jax.random.normal(k, (n, d), dtype=jnp.float32) * 2.0 + 1.0
        rm = jnp.zeros((d,), jnp.float32)
        rv = jnp.ones((d,), jnp.float32)
        cnt = jnp.ones((), jnp.float32)
        out = running_mean_std_forward(x, rm, rv, cnt, epsilon=1e-5, **kw)
        out = jax.block_until_ready(out)
        ref_kw = {kk: v for kk, v in kw.items()
                  if kk in ("training", "norm_only", "unnorm")}
        ref = _reference(x, rm, rv, cnt, epsilon=1e-5, **ref_kw)
        for nm, a, b in zip(("y", "running_mean", "running_var", "count"), out, ref):
            assert a.shape == jnp.asarray(b).shape, f"{name}: {nm} shape mismatch"
            # Tolerance accommodates EUP rsqrt and tiled reduction ordering.
            assert jnp.allclose(a, b, atol=1e-3, rtol=1e-3), f"{name}: {nm} mismatch"

    # Fused single-call path (typical small RL batch), normal + unnorm modes.
    check("fused", 200, 32, keys[0], training=True)
    check("fused-unnorm", 64, 32, keys[1], training=True, unnorm=True)
    # Streaming path: fold=4, masked partial tiles, 2-way core split.
    check("stream-mask", 200, 32, keys[2], training=True,
          allow_fused=False, tile_rows=16)
    # lcm folding D=48 -> lanes=384, exact tiling (mask compiled out), 2 splits.
    check("stream-lcm", 128, 48, keys[3], training=True,
          allow_fused=False, tile_rows=8)
    # Odd tile count -> phantom (fully masked) grid tile on split 1, norm_only.
    check("stream-phantom", 200, 32, keys[4], training=True, norm_only=True,
          allow_fused=False, tile_rows=24)
    # Fold disabled (D=33), eval mode + unnorm path.
    check("eval-unnorm", 48, 33, keys[5], training=False, unnorm=True)

    print("KERNEL_OK")
</pallas_src>

<mosaic_0001>
module attributes {stable_mosaic.version = 11 : i64} {
  func.func @_fused_kernel(%arg0: memref<50x128xf32, #tpu.memory_space<vmem>>, %arg1: memref<1x32xf32, #tpu.memory_space<vmem>>, %arg2: memref<1x32xf32, #tpu.memory_space<vmem>>, %arg3: memref<1x1xf32, #tpu.memory_space<vmem>>, %arg4: memref<50x128xf32, #tpu.memory_space<vmem>>, %arg5: memref<1x32xf32, #tpu.memory_space<vmem>>, %arg6: memref<1x32xf32, #tpu.memory_space<vmem>>, %arg7: memref<1x1xf32, #tpu.memory_space<vmem>>) attributes {dimension_semantics = [], scalar_prefetch = 0 : i64, scratch_operands = 0 : i64, tpu.core_type = #tpu.core_type<tc>} {
    %c0 = arith.constant 0 : index
    %c0_0 = arith.constant 0 : index
    %0 = vector.load %arg0[%c0, %c0_0] : memref<50x128xf32, #tpu.memory_space<vmem>>, vector<50x128xf32>
    %cst = arith.constant dense<0.000000e+00> : vector<128xf32>
    %1 = vector.multi_reduction <add>, %0, %cst [0] : vector<50x128xf32> to vector<128xf32>
    %2 = vector.shape_cast %1 : vector<128xf32> to vector<1x128xf32>
    %cst_1 = arith.constant 5.000000e+01 : f32
    %3 = vector.broadcast %cst_1 : f32 to vector<1x128xf32>
    %4 = arith.divf %2, %3 : vector<1x128xf32>
    %5 = vector.broadcast %4 : vector<1x128xf32> to vector<50x128xf32>
    %6 = arith.subf %0, %5 : vector<50x128xf32>
    %7 = arith.mulf %6, %6 : vector<50x128xf32>
    %cst_2 = arith.constant dense<0.000000e+00> : vector<128xf32>
    %8 = vector.multi_reduction <add>, %7, %cst_2 [0] : vector<50x128xf32> to vector<128xf32>
    %9 = vector.shape_cast %8 : vector<128xf32> to vector<1x128xf32>
    %10 = vector.extract_strided_slice %4 {offsets = [0, 0], sizes = [1, 32], strides = [1, 1]} : vector<1x128xf32> to vector<1x32xf32>
    %11 = vector.extract_strided_slice %4 {offsets = [0, 32], sizes = [1, 32], strides = [1, 1]} : vector<1x128xf32> to vector<1x32xf32>
    %12 = vector.extract_strided_slice %4 {offsets = [0, 64], sizes = [1, 32], strides = [1, 1]} : vector<1x128xf32> to vector<1x32xf32>
    %13 = vector.extract_strided_slice %4 {offsets = [0, 96], sizes = [1, 32], strides = [1, 1]} : vector<1x128xf32> to vector<1x32xf32>
    %14 = vector.extract_strided_slice %9 {offsets = [0, 0], sizes = [1, 32], strides = [1, 1]} : vector<1x128xf32> to vector<1x32xf32>
    %15 = vector.extract_strided_slice %9 {offsets = [0, 32], sizes = [1, 32], strides = [1, 1]} : vector<1x128xf32> to vector<1x32xf32>
    %16 = vector.extract_strided_slice %9 {offsets = [0, 64], sizes = [1, 32], strides = [1, 1]} : vector<1x128xf32> to vector<1x32xf32>
    %17 = vector.extract_strided_slice %9 {offsets = [0, 96], sizes = [1, 32], strides = [1, 1]} : vector<1x128xf32> to vector<1x32xf32>
    %cst_3 = arith.constant 0.000000e+00 : f32
    %18 = vector.broadcast %cst_3 : f32 to vector<1x32xf32>
    %19 = arith.addf %18, %10 : vector<1x32xf32>
    %20 = arith.addf %19, %11 : vector<1x32xf32>
    %21 = arith.addf %20, %12 : vector<1x32xf32>
    %22 = arith.addf %21, %13 : vector<1x32xf32>
    %cst_4 = arith.constant 2.500000e-01 : f32
    %23 = vector.broadcast %cst_4 : f32 to vector<1x32xf32>
    %24 = arith.mulf %22, %23 : vector<1x32xf32>
    %cst_5 = arith.constant 0.000000e+00 : f32
    %25 = vector.broadcast %cst_5 : f32 to vector<1x32xf32>
    %26 = arith.addf %25, %14 : vector<1x32xf32>
    %27 = arith.addf %26, %15 : vector<1x32xf32>
    %28 = arith.addf %27, %16 : vector<1x32xf32>
    %29 = arith.addf %28, %17 : vector<1x32xf32>
    %30 = arith.subf %10, %24 : vector<1x32xf32>
    %31 = arith.subf %10, %24 : vector<1x32xf32>
    %32 = arith.mulf %30, %31 : vector<1x32xf32>
    %cst_6 = arith.constant 0.000000e+00 : f32
    %33 = vector.broadcast %cst_6 : f32 to vector<1x32xf32>
    %34 = arith.addf %33, %32 : vector<1x32xf32>
    %35 = arith.subf %11, %24 : vector<1x32xf32>
    %36 = arith.subf %11, %24 : vector<1x32xf32>
    %37 = arith.mulf %35, %36 : vector<1x32xf32>
    %38 = arith.addf %34, %37 : vector<1x32xf32>
    %39 = arith.subf %12, %24 : vector<1x32xf32>
    %40 = arith.subf %12, %24 : vector<1x32xf32>
    %41 = arith.mulf %39, %40 : vector<1x32xf32>
    %42 = arith.addf %38, %41 : vector<1x32xf32>
    %43 = arith.subf %13, %24 : vector<1x32xf32>
    %44 = arith.subf %13, %24 : vector<1x32xf32>
    %45 = arith.mulf %43, %44 : vector<1x32xf32>
    %46 = arith.addf %42, %45 : vector<1x32xf32>
    %cst_7 = arith.constant 5.000000e+01 : f32
    %47 = vector.broadcast %cst_7 : f32 to vector<1x32xf32>
    %48 = arith.mulf %47, %46 : vector<1x32xf32>
    %49 = arith.addf %29, %48 : vector<1x32xf32>
    %cst_8 = arith.constant 1.990000e+02 : f32
    %50 = vector.broadcast %cst_8 : f32 to vector<1x32xf32>
    %51 = arith.divf %49, %50 : vector<1x32xf32>
    %c0_9 = arith.constant 0 : index
    %c0_10 = arith.constant 0 : index
    %52 = vector.load %arg1[%c0_9, %c0_10] : memref<1x32xf32, #tpu.memory_space<vmem>>, vector<1x32xf32>
    %c0_11 = arith.constant 0 : index
    %c0_12 = arith.constant 0 : index
    %53 = vector.load %arg2[%c0_11, %c0_12] : memref<1x32xf32, #tpu.memory_space<vmem>>, vector<1x32xf32>
    %c0_13 = arith.constant 0 : index
    %c0_14 = arith.constant 0 : index
    %54 = vector.load %arg3[%c0_13, %c0_14] : memref<1x1xf32, #tpu.memory_space<vmem>>, vector<1x1xf32>
    %55 = arith.subf %24, %52 : vector<1x32xf32>
    %cst_15 = arith.constant 2.000000e+02 : f32
    %56 = vector.broadcast %cst_15 : f32 to vector<1x1xf32>
    %57 = arith.addf %54, %56 : vector<1x1xf32>
    %cst_16 = arith.constant 2.000000e+02 : f32
    %58 = vector.broadcast %cst_16 : f32 to vector<1x1xf32>
    %59 = arith.divf %58, %57 : vector<1x1xf32>
    %60 = vector.broadcast %59 : vector<1x1xf32> to vector<1x32xf32>
    %61 = arith.mulf %55, %60 : vector<1x32xf32>
    %62 = arith.addf %52, %61 : vector<1x32xf32>
    %63 = vector.broadcast %54 : vector<1x1xf32> to vector<1x32xf32>
    %64 = arith.mulf %53, %63 : vector<1x32xf32>
    %cst_17 = arith.constant 2.000000e+02 : f32
    %65 = vector.broadcast %cst_17 : f32 to vector<1x32xf32>
    %66 = arith.mulf %51, %65 : vector<1x32xf32>
    %67 = arith.addf %64, %66 : vector<1x32xf32>
    %68 = arith.mulf %55, %55 : vector<1x32xf32>
    %cst_18 = arith.constant 2.000000e+02 : f32
    %69 = vector.broadcast %cst_18 : f32 to vector<1x1xf32>
    %70 = arith.mulf %54, %69 : vector<1x1xf32>
    %71 = arith.divf %70, %57 : vector<1x1xf32>
    %72 = vector.broadcast %71 : vector<1x1xf32> to vector<1x32xf32>
    %73 = arith.mulf %68, %72 : vector<1x32xf32>
    %74 = arith.addf %67, %73 : vector<1x32xf32>
    %75 = vector.broadcast %57 : vector<1x1xf32> to vector<1x32xf32>
    %76 = arith.divf %74, %75 : vector<1x32xf32>
    %c0_19 = arith.constant 0 : index
    %c0_20 = arith.constant 0 : index
    %77 = vector.load %arg5[%c0_19, %c0_20] : memref<1x32xf32, #tpu.memory_space<vmem>>, vector<1x32xf32>
    tpu.vector_store %arg5[%c0_19, %c0_20], %62 {strides = array<i32>} : memref<1x32xf32, #tpu.memory_space<vmem>>, vector<1x32xf32>,
    %c0_21 = arith.constant 0 : index
    %c0_22 = arith.constant 0 : index
    %78 = vector.load %arg6[%c0_21, %c0_22] : memref<1x32xf32, #tpu.memory_space<vmem>>, vector<1x32xf32>
    tpu.vector_store %arg6[%c0_21, %c0_22], %76 {strides = array<i32>} : memref<1x32xf32, #tpu.memory_space<vmem>>, vector<1x32xf32>,
    %c0_23 = arith.constant 0 : index
    %c0_24 = arith.constant 0 : index
    %79 = vector.load %arg7[%c0_23, %c0_24] : memref<1x1xf32, #tpu.memory_space<vmem>>, vector<1x1xf32>
    tpu.vector_store %arg7[%c0_23, %c0_24], %57 {strides = array<i32>} : memref<1x1xf32, #tpu.memory_space<vmem>>, vector<1x1xf32>,
    %cst_25 = arith.constant 9.99999974E-6 : f32
    %80 = vector.broadcast %cst_25 : f32 to vector<1x32xf32>
    %81 = arith.addf %76, %80 : vector<1x32xf32>
    %82 = math.rsqrt %81 : vector<1x32xf32>
    %cst_26 = arith.constant 0.000000e+00 : f32
    %83 = vector.broadcast %cst_26 : f32 to vector<1x32xf32>
    %84 = arith.subf %83, %62 : vector<1x32xf32>
    %85 = arith.mulf %84, %82 : vector<1x32xf32>
    %86 = tpu.concatenate %82, %82, %82, %82 in 1 : vector<1x32xf32>, vector<1x32xf32>, vector<1x32xf32>, vector<1x32xf32> -> vector<1x128xf32>
    %87 = tpu.concatenate %85, %85, %85, %85 in 1 : vector<1x32xf32>, vector<1x32xf32>, vector<1x32xf32>, vector<1x32xf32> -> vector<1x128xf32>
    %88 = vector.broadcast %86 : vector<1x128xf32> to vector<50x128xf32>
    %89 = arith.mulf %0, %88 : vector<50x128xf32>
    %90 = vector.broadcast %87 : vector<1x128xf32> to vector<50x128xf32>
    %91 = arith.addf %89, %90 : vector<50x128xf32>
    %cst_27 = arith.constant -5.000000e+00 : f32
    %cst_28 = arith.constant 5.000000e+00 : f32
    %92 = vector.broadcast %cst_27 : f32 to vector<50x128xf32>
    %93 = arith.maximumf %92, %91 : vector<50x128xf32>
    %94 = vector.broadcast %cst_28 : f32 to vector<50x128xf32>
    %95 = arith.minimumf %94, %93 : vector<50x128xf32>
    %c0_29 = arith.constant 0 : index
    %c0_30 = arith.constant 0 : index
    %96 = vector.load %arg4[%c0_29, %c0_30] : memref<50x128xf32, #tpu.memory_space<vmem>>, vector<50x128xf32>
    tpu.vector_store %arg4[%c0_29, %c0_30], %95 {strides = array<i32>} : memref<50x128xf32, #tpu.memory_space<vmem>>, vector<50x128xf32>,
    return
  }
}

</mosaic_0001>

<llo_original>
// kernel: tpu_custom_call.1
$region0: #{tpu_custom_call.1}
  #allocation0 [shape = 'u32[]', space=smem, size = 0x4, offset = 0x4, fixed_abs, tag = 'smem constant byte address 0x4 - core index']
  #allocation1 [shape = 'u32[144,128]{1,0:T(1,128)}', space=vmem, size = 0x12000, scoped, tag = 'internal scratch']
  #allocation2 [shape = 'f32[1,1]{1,0:T(1,128)S(1)}', space=vmem, size = 0x200, scoped, tag = 'scoped memory for tpu_custom_call.1']
  %s0 = inlined_call_operand.hbm [shape: f32[50,128], index: 0, kind: input, shape index: {}]
  %s1 = inlined_call_operand.vmem [shape: f32[1,32], index: 1, kind: input, shape index: {}]
  %s2 = inlined_call_operand.vmem [shape: f32[1,32], index: 2, kind: input, shape index: {}]
  %s3 = inlined_call_operand.<no memory space> [shape: f32[1,1], index: 3, kind: input, shape index: {}]
  %s4 = inlined_call_operand.hbm [shape: f32[50,128], index: 4, kind: output, shape index: {0}]
  %s5 = inlined_call_operand.hbm [shape: f32[1,32], index: 5, kind: output, shape index: {1}]
  %s6 = inlined_call_operand.hbm [shape: f32[1,32], index: 6, kind: output, shape index: {2}]
  %s7 = inlined_call_operand.hbm [shape: f32[1,1], index: 7, kind: output, shape index: {3}]
  %8 = xla_tuple %s4, %s5, %s6, %s7
  %s9 = sld [smem:[#allocation0]]
  $region54: #{tpu_custom_call.1} parent=0
    _
  %s11 = ssub.s32 1, %s9
  %s12 = scalar_select 0, %s11, %s9
  %v13 = vstv %s3
  %14 = vst [vmem:[#allocation2] sm:$0x1] %v13
  $region1: #{tpu_custom_call.1} parent=0
    #allocation3 [shape = 'u8[28672]{0}', space=vmem, size = 0x7000, scoped, tag = 'input window, operand 0, single buffered']
    #allocation4 [shape = 's32[1]{0}', space=sflag, size = 0x4, scoped, tag = 'scoped memory for tpu_custom_call.1']
    #allocation5 [shape = 's32[1]{0}', space=sflag, size = 0x4, scoped, tag = 'scoped memory for tpu_custom_call.1']
    #allocation6 [shape = 'u8[28672]{0}', space=vmem, size = 0x7000, scoped, tag = 'output window, operand 0, single buffered']
    #allocation7 [shape = 'u8[512]{0}', space=vmem, size = 0x400, scoped, tag = 'output window, operand 1, single buffered']
    #allocation8 [shape = 's32[1]{0}', space=sflag, size = 0x4, scoped, tag = 'scoped memory for tpu_custom_call.1']
    #allocation9 [shape = 'u8[512]{0}', space=vmem, size = 0x400, scoped, tag = 'output window, operand 2, single buffered']
    #allocation10 [shape = 'u8[512]{0}', space=vmem, size = 0x400, scoped, tag = 'output window, operand 3, single buffered']
    #allocation11 [shape = 's32[1]{0}', space=sflag, size = 0x4, scoped, tag = 'scoped memory for tpu_custom_call.1']
    %15 = vsyncpa [#allocation4], 0
    %16 = vsyncpa [#allocation5], 0
    %17 = vsyncpa [#allocation8], 0
    %18 = vsyncpa [#allocation11], 0
    // Predicated region
    $region2: #{tpu_custom_call.1} parent=1 // pred_check
      _
    $region3: #{tpu_custom_call.1} parent=1 // pred_check_branch
      %20 = sbr.rel (0) target = $region5
    $region4: #{tpu_custom_call.1} parent=1 // pred_region
      %s22 = ssub.s32 896, 896
      %23 = vsyncadd [#allocation4], %s22
      %s24 = sshll.u32 [#allocation3], 4
      %s25 = int_to_ptr.vmem [resolvable:$true] %s24
      %30 = dma.hbm_to_vmem [thread:$0]  %s0, 896, %s25, [#allocation4], 128, 128, 8
    $region5: #{tpu_custom_call.1} parent=1 // pred_fallthru
      _
    // Predicated region
    $region6: #{tpu_custom_call.1} parent=1 // pred_check
      _
    $region7: #{tpu_custom_call.1} parent=1 // pred_check_branch
      %32 = sbr.rel (0) target = $region9
    $region8: #{tpu_custom_call.1} parent=1 // pred_region
      _
    $region9: #{tpu_custom_call.1} parent=1 // pred_fallthru
      _
    // Predicated region
    $region10: #{tpu_custom_call.1} parent=1 // pred_check
      _
    $region11: #{tpu_custom_call.1} parent=1 // pred_check_branch
      %34 = sbr.rel (0) target = $region13
    $region12: #{tpu_custom_call.1} parent=1 // pred_region
      _
    $region13: #{tpu_custom_call.1} parent=1 // pred_fallthru
      _
    // Predicated region
    $region14: #{tpu_custom_call.1} parent=1 // pred_check
      _
    $region15: #{tpu_custom_call.1} parent=1 // pred_check_branch
      %36 = sbr.rel (0) target = $region17
    $region16: #{tpu_custom_call.1} parent=1 // pred_region
      _
    $region17: #{tpu_custom_call.1} parent=1 // pred_fallthru
      _
    // Predicated region
    $region18: #{tpu_custom_call.1} parent=1 // pred_check
      _
    $region19: #{tpu_custom_call.1} parent=1 // pred_check_branch
      %38 = sbr.rel (0) target = $region21
    $region20: #{tpu_custom_call.1} parent=1 // pred_region
      %39 = dma.done [#allocation4], 896
    $region21: #{tpu_custom_call.1} parent=1 // pred_fallthru
      _
    %v40 = vld [vmem:[#allocation3] sm:$0xff]
    %v41 = vld [vmem:[#allocation3 + $0x8] sm:$0xff]
    %v42 = vld [vmem:[#allocation3 + $0x10] sm:$0xff]
    %v43 = vld [vmem:[#allocation3 + $0x18] sm:$0xff]
    %v44 = vld [vmem:[#allocation3 + $0x20] sm:$0xff]
    %v45 = vld [vmem:[#allocation3 + $0x28] sm:$0xff]
    %v46 = vld [vmem:[#allocation3 + $0x30] sm:$0x3]
    %v47 = vadd.f32 %v40, %v41
    %v48 = vadd.f32 %v47, %v42
    %v49 = vadd.f32 %v48, %v43
    %v50 = vadd.f32 %v49, %v44
    %v51 = vadd.f32 %v50, %v45
    %vm52 = vcmask 1041408
    %v53 = vsel %vm52, %v46, 0.0
    %v54 = vadd.f32 %v51, %v53
    %v55 = vrot.slane %v54, 4
    %v56 = vadd.f32 %v54, %v55
    %v57 = vrot.slane %v56, 2
    %v58 = vadd.f32 %v56, %v57
    %v59 = vrot.slane %v58, 1
    %v60 = vadd.f32 %v58, %v59
    %v61 = vrcp.pop 50.0
    %v62 = vmul.f32 %v60, %v61
    %v63 = vsub.f32 %v40, %v62
    %v64 = vsub.f32 %v41, %v62
    %v65 = vsub.f32 %v42, %v62
    %v66 = vsub.f32 %v43, %v62
    %v67 = vsub.f32 %v44, %v62
    %v68 = vsub.f32 %v45, %v62
    %v69 = vsub.f32 %v46, %v62
    %v70 = vmul.f32 %v63, %v63
    %v71 = vmul.f32 %v64, %v64
    %v72 = vmul.f32 %v65, %v65
    %v73 = vmul.f32 %v66, %v66
    %v74 = vmul.f32 %v67, %v67
    %v75 = vmul.f32 %v68, %v68
    %v76 = vmul.f32 %v69, %v69
    %v77 = vadd.f32 %v70, %v71
    %v78 = vadd.f32 %v77, %v72
    %v79 = vadd.f32 %v78, %v73
    %v80 = vadd.f32 %v79, %v74
    %v81 = vadd.f32 %v80, %v75
    %v82 = vsel %vm52, %v76, 0.0
    %v83 = vadd.f32 %v81, %v82
    %v84 = vrot.slane %v83, 4
    %v85 = vadd.f32 %v83, %v84
    %v86 = vrot.slane %v85, 2
    %v87 = vadd.f32 %v85, %v86
    %v88 = vrot.slane %v87, 1
    %v89 = vadd.f32 %v87, %v88
    %v90 = vadd.f32 %v62, 0.0
    %92 = vrot.lane.b32.xlu0 %v62, 96
    %v93 = vpop.permute.xlu0 %92
    %v95 = vadd.f32 %v90, %v93
    %96 = vrot.lane.b32.xlu0 %v62, 64
    %v97 = vpop.permute.xlu0 %96
    %v99 = vadd.f32 %v95, %v97
    %100 = vrot.lane.b32.xlu0 %v62, 32
    %v101 = vpop.permute.xlu0 %100
    %v103 = vadd.f32 %v99, %v101
    %v104 = vmul.f32 %v103, 0.25
    %v105 = vadd.f32 %v89, 0.0
    %107 = vrot.lane.b32.xlu0 %v89, 96
    %v108 = vpop.permute.xlu0 %107
    %v110 = vadd.f32 %v105, %v108
    %111 = vrot.lane.b32.xlu0 %v89, 64
    %v112 = vpop.permute.xlu0 %111
    %v114 = vadd.f32 %v110, %v112
    %115 = vrot.lane.b32.xlu0 %v89, 32
    %v116 = vpop.permute.xlu0 %115
    %v118 = vadd.f32 %v114, %v116
    %v119 = vsub.f32 %v62, %v104
    %v120 = vmul.f32 %v119, %v119
    %v121 = vadd.f32 %v120, 0.0
    %123 = vrot.lane.b32.xlu0 %v104, 32
    %v124 = vpop.permute.xlu0 %123
    %v126 = vsub.f32 %v62, %v124
    %v127 = vmul.f32 %v126, %v126
    %129 = vrot.lane.b32.xlu0 %v127, 96
    %v130 = vpop.permute.xlu0 %129
    %v132 = vadd.f32 %v121, %v130
    %133 = vrot.lane.b32.xlu0 %v104, 64
    %v134 = vpop.permute.xlu0 %133
    %v136 = vsub.f32 %v62, %v134
    %v137 = vmul.f32 %v136, %v136
    %139 = vrot.lane.b32.xlu0 %v137, 64
    %v140 = vpop.permute.xlu0 %139
    %v142 = vadd.f32 %v132, %v140
    %143 = vrot.lane.b32.xlu0 %v104, 96
    %v144 = vpop.permute.xlu0 %143
    %v146 = vsub.f32 %v62, %v144
    %v147 = vmul.f32 %v146, %v146
    %149 = vrot.lane.b32.xlu0 %v147, 32
    %v150 = vpop.permute.xlu0 %149
    %v152 = vadd.f32 %v142, %v150
    %v153 = vmul.f32 %v152, 50.0
    %v154 = vadd.f32 %v118, %v153
    %v155 = vrcp.pop 199.0
    %v156 = vmul.f32 %v154, %v155
    %v157 = vld [vmem:[%s1] sm:$0x1]
    %v158 = vld [vmem:[%s2] sm:$0x1]
    %v159 = vld [vmem:[#allocation2] sm:$0x1]
    %v160 = vsub.f32 %v104, %v157
    %v161 = vadd.f32 %v159, 200.0
    %v162 = vrcp.pop %v161
    %v163 = vmul.f32 200.0, %v162
    %165 = vset.pattern.permute.xlu0 0
    %166 = vperm.xlu0 %165, %v163
    %v167 = vpop.permute.xlu0 %166
    %v169 = vlaneseq
    %v170 = vshrl.u32 %v169, 7
    %v171 = vsub.s32 0, %v170
    %v172 = vrot.slane %v167, %v171
    %v173 = vmul.f32 %v160, %v172
    %v174 = vadd.f32 %v157, %v173
    %176 = vset.pattern.permute.xlu0 0
    %177 = vperm.xlu0 %176, %v159
    %v178 = vpop.permute.xlu0 %177
    %v180 = vlaneseq
    %v181 = vshrl.u32 %v180, 7
    %v182 = vsub.s32 0, %v181
    %v183 = vrot.slane %v178, %v182
    %v184 = vmul.f32 %v158, %v183
    %v185 = vmul.f32 %v156, 200.0
    %v186 = vadd.f32 %v184, %v185
    %v187 = vmul.f32 %v160, %v160
    %v188 = vmul.f32 %v159, 200.0
    %v189 = vmul.f32 %v188, %v162
    %191 = vset.pattern.permute.xlu0 0
    %192 = vperm.xlu0 %191, %v189
    %v193 = vpop.permute.xlu0 %192
    %v195 = vlaneseq
    %v196 = vshrl.u32 %v195, 7
    %v197 = vsub.s32 0, %v196
    %v198 = vrot.slane %v193, %v197
    %v199 = vmul.f32 %v187, %v198
    %v200 = vadd.f32 %v186, %v199
    %202 = vset.pattern.permute.xlu0 0
    %203 = vperm.xlu0 %202, %v161
    %v204 = vpop.permute.xlu0 %203
    %v206 = vlaneseq
    %v207 = vshrl.u32 %v206, 7
    %v208 = vsub.s32 0, %v207
    %v209 = vrot.slane %v204, %v208
    %v210 = vrcp.pop %v209
    %v211 = vmul.f32 %v200, %v210
    %vm212 = vcmask 253952
    %213 = vst.msk [vmem:[#allocation7] sm:$0x1] %vm212, %v174
    %214 = vst.msk [vmem:[#allocation9] sm:$0x1] %vm212, %v211
    %vm215 = vcmask 0
    %216 = vst.msk [vmem:[#allocation10] sm:$0x1] %vm215, %v161
    %v217 = vadd.f32 %v211, 1e-05
    %v218 = vrsqrt.pop %v217
    %v219 = vsub.f32 0.0, %v174
    %v220 = vmul.f32 %v219, %v218
    %v222 = vlaneseq
    %v223 = vshrl.u32 %v222, 7
    %v224 = vsub.s32 0, %v223
    %v225 = vrot.slane %v218, %v224
    %226 = vrot.lane.b32.xlu0 %v225, 32
    %v227 = vpop.permute.xlu0 %226
    %229 = vrot.lane.b32.xlu0 %v225, 64
    %v230 = vpop.permute.xlu0 %229
    %232 = vrot.lane.b32.xlu0 %v225, 96
    %v233 = vpop.permute.xlu0 %232
    %vm235 = vcmask 261120
    %v236 = vsel %vm235, %v218, %v227
    %vm237 = vcmask 523264
    %v238 = vsel %vm237, %v236, %v230
    %vm239 = vcmask 785408
    %v240 = vsel %vm239, %v238, %v233
    %v242 = vlaneseq
    %v243 = vshrl.u32 %v242, 7
    %v244 = vsub.s32 0, %v243
    %v245 = vrot.slane %v220, %v244
    %246 = vrot.lane.b32.xlu0 %v245, 32
    %v247 = vpop.permute.xlu0 %246
    %249 = vrot.lane.b32.xlu0 %v245, 64
    %v250 = vpop.permute.xlu0 %249
    %252 = vrot.lane.b32.xlu0 %v245, 96
    %v253 = vpop.permute.xlu0 %252
    %v255 = vsel %vm235, %v220, %v247
    %v256 = vsel %vm237, %v255, %v250
    %v257 = vsel %vm239, %v256, %v253
    %v258 = vlaneseq
    %v259 = vshrl.u32 %v258, 7
    %v260 = vsub.s32 0, %v259
    %v261 = vrot.slane %v240, %v260
    %v262 = vmul.f32 %v40, %v261
    %v263 = vmul.f32 %v41, %v261
    %v264 = vmul.f32 %v42, %v261
    %v265 = vmul.f32 %v43, %v261
    %v266 = vmul.f32 %v44, %v261
    %v267 = vmul.f32 %v45, %v261
    %v268 = vmul.f32 %v46, %v261
    %v269 = vlaneseq
    %v270 = vshrl.u32 %v269, 7
    %v271 = vsub.s32 0, %v270
    %v272 = vrot.slane %v257, %v271
    %v273 = vadd.f32 %v262, %v272
    %v274 = vadd.f32 %v263, %v272
    %v275 = vadd.f32 %v264, %v272
    %v276 = vadd.f32 %v265, %v272
    %v277 = vadd.f32 %v266, %v272
    %v278 = vadd.f32 %v267, %v272
    %v279 = vadd.f32 %v268, %v272
    %v280 = vmax.f32 %v273, -5.0
    %v281 = vmax.f32 %v274, -5.0
    %v282 = vmax.f32 %v275, -5.0
    %v283 = vmax.f32 %v276, -5.0
    %v284 = vmax.f32 %v277, -5.0
    %v285 = vmax.f32 %v278, -5.0
    %v286 = vmax.f32 %v279, -5.0
    %v287 = vmin.f32 %v280, 5.0
    %v288 = vmin.f32 %v281, 5.0
    %v289 = vmin.f32 %v282, 5.0
    %v290 = vmin.f32 %v283, 5.0
    %v291 = vmin.f32 %v284, 5.0
    %v292 = vmin.f32 %v285, 5.0
    %v293 = vmin.f32 %v286, 5.0
    %294 = vst [vmem:[#allocation6] sm:$0xff] %v287
    %295 = vst [vmem:[#allocation6 + $0x8] sm:$0xff] %v288
    %296 = vst [vmem:[#allocation6 + $0x10] sm:$0xff] %v289
    %297 = vst [vmem:[#allocation6 + $0x18] sm:$0xff] %v290
    %298 = vst [vmem:[#allocation6 + $0x20] sm:$0xff] %v291
    %299 = vst [vmem:[#allocation6 + $0x28] sm:$0xff] %v292
    %300 = vst [vmem:[#allocation6 + $0x30] sm:$0x3] %v293
    // Predicated region
    $region22: #{tpu_custom_call.1} parent=1 // pred_check
      _
    $region23: #{tpu_custom_call.1} parent=1 // pred_check_branch
      %302 = sbr.rel (0) target = $region25
    $region24: #{tpu_custom_call.1} parent=1 // pred_region
      %s304 = ssub.s32 896, 896
      %305 = vsyncadd [#allocation5], %s304
      %s306 = sshll.u32 [#allocation6], 4
      %s307 = int_to_ptr.vmem [resolvable:$true] %s306
      %312 = dma.vmem_to_hbm [thread:$0]  %s307, 896, %s4, [#allocation5], 128, 128, 8
    $region25: #{tpu_custom_call.1} parent=1 // pred_fallthru
      _
    // Predicated region
    $region26: #{tpu_custom_call.1} parent=1 // pred_check
      _
    $region27: #{tpu_custom_call.1} parent=1 // pred_check_branch
      %314 = sbr.rel (0) target = $region29
    $region28: #{tpu_custom_call.1} parent=1 // pred_region
      %s316 = ssub.s32 16, 16
      %317 = vsyncadd [#allocation8], %s316
      %s319 = sshll.u32 [#allocation7], 4
      %s320 = int_to_ptr.vmem [resolvable:$true] %s319
      %322 = dma.vmem_to_hbm [thread:$0]  %s320, 16, %s5, [#allocation8]
    $region29: #{tpu_custom_call.1} parent=1 // pred_fallthru
      _
    // Predicated region
    $region30: #{tpu_custom_call.1} parent=1 // pred_check
      _
    $region31: #{tpu_custom_call.1} parent=1 // pred_check_branch
      %324 = sbr.rel (0) target = $region33
    $region32: #{tpu_custom_call.1} parent=1 // pred_region
      %s326 = ssub.s32 16, 16
      %327 = vsyncadd [#allocation8], %s326
      %s329 = sshll.u32 [#allocation9], 4
      %s330 = int_to_ptr.vmem [resolvable:$true] %s329
      %332 = dma.vmem_to_hbm [thread:$0]  %s330, 16, %s6, [#allocation8]
    $region33: #{tpu_custom_call.1} parent=1 // pred_fallthru
      _
    // Predicated region
    $region34: #{tpu_custom_call.1} parent=1 // pred_check
      _
    $region35: #{tpu_custom_call.1} parent=1 // pred_check_branch
      %334 = sbr.rel (0) target = $region37
    $region36: #{tpu_custom_call.1} parent=1 // pred_region
      %s336 = ssub.s32 16, 16
      %337 = vsyncadd [#allocation11], %s336
      %s339 = sshll.u32 [#allocation10], 4
      %s340 = int_to_ptr.vmem [resolvable:$true] %s339
      %342 = dma.vmem_to_hbm [thread:$0]  %s340, 16, %s7, [#allocation11]
    $region37: #{tpu_custom_call.1} parent=1 // pred_fallthru
      _
    // Predicated region
    $region38: #{tpu_custom_call.1} parent=1 // pred_check
      _
    $region39: #{tpu_custom_call.1} parent=1 // pred_check_branch
      %344 = sbr.rel (0) target = $region41
    $region40: #{tpu_custom_call.1} parent=1 // pred_region
      %345 = dma.done [#allocation5], 896
    $region41: #{tpu_custom_call.1} parent=1 // pred_fallthru
      _
    // Predicated region
    $region42: #{tpu_custom_call.1} parent=1 // pred_check
      _
    $region43: #{tpu_custom_call.1} parent=1 // pred_check_branch
      %347 = sbr.rel (0) target = $region45
    $region44: #{tpu_custom_call.1} parent=1 // pred_region
      %348 = dma.done [#allocation8], 16
    $region45: #{tpu_custom_call.1} parent=1 // pred_fallthru
      _
    // Predicated region
    $region46: #{tpu_custom_call.1} parent=1 // pred_check
      _
    $region47: #{tpu_custom_call.1} parent=1 // pred_check_branch
      %350 = sbr.rel (0) target = $region49
    $region48: #{tpu_custom_call.1} parent=1 // pred_region
      %351 = dma.done [#allocation8], 16
    $region49: #{tpu_custom_call.1} parent=1 // pred_fallthru
      _
    // Predicated region
    $region50: #{tpu_custom_call.1} parent=1 // pred_check
      _
    $region51: #{tpu_custom_call.1} parent=1 // pred_check_branch
      %353 = sbr.rel (0) target = $region53
    $region52: #{tpu_custom_call.1} parent=1 // pred_region
      %354 = dma.done [#allocation11], 16
    $region53: #{tpu_custom_call.1} parent=1 // pred_fallthru
      _
    %355 = vsyncpa [#allocation4], 1
    %356 = vsyncpa [#allocation5], 1
    %357 = vsyncpa [#allocation8], 1
    %358 = vsyncpa [#allocation11], 1

</llo_original>
